<compile_context>
chip_gen: v7x
topology: tpu7x:2x2x1
jax: 0.10.0
libtpu: 0.0.40
codegen_flags: <defaults>
</compile_context>

<pallas_src>
import functools

import jax
import jax.numpy as jnp
from jax.experimental import pallas as pl
from jax.experimental.pallas import tpu as pltpu

_LOG_EPS = -69.07755278982137  # log(1e-30)


def _lse_kernel(x_ref, lse_ref, m_ref, s_ref, *, n_classes, tc, ragged):
    """Online (flash-style) log-sum-exp over class tiles; emits per-row LSE."""
    k = pl.program_id(1)  # class-tile index (reduction axis, innermost)

    @pl.when(k == 0)
    def _():
        m_ref[...] = jnp.full_like(m_ref, -jnp.inf)
        s_ref[...] = jnp.zeros_like(s_ref)

    x = x_ref[...].astype(jnp.float32)                       # (tb, tc), f32 math
    if ragged:
        # Mask out-of-range (padded) class columns of the ragged last tile.
        col = jax.lax.broadcasted_iota(jnp.int32, (1, tc), 1) + k * tc
        x = jnp.where(col < n_classes, x, -jnp.inf)

    tile_max = jnp.max(x, axis=1, keepdims=True)             # (tb, 1)
    m_new = jnp.maximum(m_ref[...], tile_max)
    s_ref[...] = (s_ref[...] * jnp.exp(m_ref[...] - m_new)   # exp(-inf - finite) == 0 on tile 0
                  + jnp.sum(jnp.exp(x - m_new), axis=1, keepdims=True))
    m_ref[...] = m_new

    @pl.when(k == pl.num_programs(1) - 1)
    def _():
        lse_ref[...] = m_ref[...] + jnp.log(s_ref[...])


def _cdiv(a: int, b: int) -> int:
    return (a + b - 1) // b


def _round_up(a: int, b: int) -> int:
    return _cdiv(a, b) * b


def _pick_class_tile(C: int, cap: int = 8192, align: int = 128) -> int:
    """Class tile: lane-aligned, bounded by `cap` (never falls back to full C)."""
    c_pad = _round_up(C, align)
    if c_pad <= cap:
        return c_pad
    # Largest 128-aligned divisor of the padded class dim in [2048, cap]: divides evenly
    # (or leaves only < 128 masked columns) while keeping >= multi-MiB steps.
    for t in range(cap // align, 2048 // align - 1, -1):
        tc = t * align
        if c_pad % tc == 0:
            return tc
    return cap  # no good divisor -> use the cap; ragged last tile is masked in-kernel


def _pick_batch_tile(B: int, itemsize: int, cap: int = 256) -> int:
    """Batch tile: dtype-aware sublane alignment, >= 2 tiles when possible (v7x megacore)."""
    align = max(8, 32 // itemsize)          # 8 for f32, 16 for bf16, 32 for int8/fp8
    if B <= align:
        return align
    n_tiles = max(2, _cdiv(B, cap))
    return min(cap, _round_up(_cdiv(B, n_tiles), align))


def dist_cross_entropy(logits: jax.Array, label: jax.Array, *, tb=None, tc=None) -> jax.Array:
    """Forward of DistCrossEntropy. logits: (B, C) float, label: (B, 1) int."""
    B, C = logits.shape
    assert label.shape == (B, 1)
    label = label.astype(jnp.int32)

    itemsize = jnp.dtype(logits.dtype).itemsize
    if tb is None:
        tb = _pick_batch_tile(B, itemsize)
    if tc is None:
        tc = _pick_class_tile(C)
    assert tb % 8 == 0 and tc % 128 == 0, "tiles must respect TPU (8,128) alignment"

    ragged_c = (C % tc) != 0
    grid = (_cdiv(B, tb), _cdiv(C, tc))

    # VMEM budget from the real footprint: 2 double-buffered logits tiles + headroom.
    tile_bytes = tb * tc * itemsize
    vmem_limit = int(min(max(2 * tile_bytes + (4 << 20), 16 << 20), 96 << 20))

    kernel = functools.partial(_lse_kernel, n_classes=C, tc=tc, ragged=ragged_c)

    lse = pl.pallas_call(
        kernel,
        out_shape=jax.ShapeDtypeStruct((B, 1), jnp.float32),
        grid_spec=pltpu.PrefetchScalarGridSpec(
            num_scalar_prefetch=0,
            grid=grid,                                        # reduction (class) axis last
            in_specs=[pl.BlockSpec((tb, tc), lambda i, k: (i, k))],
            out_specs=pl.BlockSpec((tb, 1), lambda i, k: (i, 0)),
            scratch_shapes=[
                pltpu.VMEM((tb, 1), jnp.float32),             # running max
                pltpu.VMEM((tb, 1), jnp.float32),             # running sum of exp
            ],
        ),
        compiler_params=pltpu.CompilerParams(
            dimension_semantics=("parallel", "arbitrary"),    # batch tiles independent
            vmem_limit_bytes=vmem_limit,
        ),
    )(logits)

    # O(B) epilogue in plain JAX: gather logit at the label, log-softmax, clamp, -mean.
    # Caller contract: out-of-shard labels must be remapped to -1 (as in the torch code).
    lab = label[:, 0]
    safe_idx = jnp.clip(label, 0, C - 1)
    x_lab = jnp.take_along_axis(logits, safe_idx, axis=1)[:, 0].astype(jnp.float32)
    logp = x_lab - lse[:, 0]
    logp = jnp.maximum(logp, jnp.float32(_LOG_EPS))           # clamp_min_(1e-30).log_()
    logp = jnp.where(lab != -1, logp, jnp.float32(_LOG_EPS))  # ignored rows: log(1e-30)
    return -jnp.sum(logp) / jnp.float32(B)


def _reference(logits, label):
    # Pure-JAX reference mirroring the torch forward exactly.
    x = logits.astype(jnp.float32)
    x = x - jnp.max(x, axis=1, keepdims=True)
    e = jnp.exp(x)
    p = e / jnp.sum(e, axis=1, keepdims=True)
    lab = label[:, 0]
    gathered = jnp.take_along_axis(p, jnp.clip(label, 0, None), axis=1)[:, 0]
    prob = jnp.where(lab != -1, gathered, 0.0)
    return -jnp.mean(jnp.log(jnp.maximum(prob, 1e-30)))


# TODO(synk): the true distributed ("Dist") CE over class-sharded logits additionally needs
# a cross-device allreduce of the per-row max / sum-of-exp before the gather; this kernel
# implements the single-shard forward only (matching the quoted forward math on the shard).

if __name__ == "__main__":
    key = jax.random.PRNGKey(0)
    k1, k2, k3, k4 = jax.random.split(key, 4)

    # Small shapes consistent with a class-sharded CE forward.
    B, C = 16, 384
    logits = jax.random.normal(k1, (B, C), dtype=jnp.float32)
    label = jax.random.randint(k2, (B, 1), 0, C, dtype=jnp.int32)
    label = label.at[3, 0].set(-1)          # exercise the ignored-row path

    ref = _reference(logits, label)

    # Explicit multi-tile path: online LSE across class tiles, grid (2, 3).
    loss_tiled = dist_cross_entropy(logits, label, tb=8, tc=128)
    jax.block_until_ready(loss_tiled)
    assert jnp.allclose(loss_tiled, ref, rtol=1e-5, atol=1e-5), (loss_tiled, ref)

    # Default auto-tile path.
    loss_auto = dist_cross_entropy(logits, label)
    jax.block_until_ready(loss_auto)
    assert jnp.allclose(loss_auto, ref, rtol=1e-5, atol=1e-5), (loss_auto, ref)

    # bf16 logits end-to-end (halved HBM traffic); kernel math stays f32.
    logits_bf16 = logits.astype(jnp.bfloat16)
    ref_bf16 = _reference(logits_bf16, label)
    loss_bf16 = dist_cross_entropy(logits_bf16, label)
    jax.block_until_ready(loss_bf16)
    assert jnp.allclose(loss_bf16, ref_bf16, rtol=1e-4, atol=1e-4), (loss_bf16, ref_bf16)

    # Ragged shapes: B not a multiple of tb, C not a multiple of tc (in-kernel mask path).
    B2, C2 = 12, 300
    logits2 = jax.random.normal(k3, (B2, C2), dtype=jnp.float32)
    label2 = jax.random.randint(k4, (B2, 1), 0, C2, dtype=jnp.int32)
    ref2 = _reference(logits2, label2)
    loss_ragged = dist_cross_entropy(logits2, label2, tb=8, tc=128)
    jax.block_until_ready(loss_ragged)
    assert jnp.allclose(loss_ragged, ref2, rtol=1e-5, atol=1e-5), (loss_ragged, ref2)

    print("KERNEL_OK")
</pallas_src>

<mosaic_0001>
module attributes {stable_mosaic.version = 11 : i64} {
  func.func @_lse_kernel(%arg0: i32, %arg1: i32, %arg2: memref<8x128xf32, #tpu.memory_space<vmem>>, %arg3: memref<8x1xf32, #tpu.memory_space<vmem>>, %arg4: memref<8x1xf32, #tpu.memory_space<vmem>>, %arg5: memref<8x1xf32, #tpu.memory_space<vmem>>) attributes {dimension_semantics = [#tpu.dimension_semantics<parallel>, #tpu.dimension_semantics<arbitrary>], iteration_bounds = array<i64: 2, 3>, scalar_prefetch = 0 : i64, scratch_operands = 2 : i64, tpu.core_type = #tpu.core_type<tc>, window_params = [{transform_indices = @transform_0, window_bounds = array<i64: 8, 128>}, {transform_indices = @transform_1, window_bounds = array<i64: 8, 1>}]} {
    %c0_i32 = arith.constant 0 : i32
    %0 = arith.cmpi eq, %arg1, %c0_i32 : i32
    %1 = arith.extui %0 : i1 to i32
    %c0_i32_0 = arith.constant 0 : i32
    %2 = arith.cmpi ne, %1, %c0_i32_0 : i32
    scf.if %2 {
      %cst_14 = arith.constant 0xFF800000 : f32
      %24 = vector.broadcast %cst_14 : f32 to vector<8x1xf32>
      %c0_15 = arith.constant 0 : index
      %c0_16 = arith.constant 0 : index
      %25 = vector.load %arg4[%c0_15, %c0_16] : memref<8x1xf32, #tpu.memory_space<vmem>>, vector<8x1xf32>
      tpu.vector_store %arg4[%c0_15, %c0_16], %24 {strides = array<i32>} : memref<8x1xf32, #tpu.memory_space<vmem>>, vector<8x1xf32>,
      %cst_17 = arith.constant 0.000000e+00 : f32
      %26 = vector.broadcast %cst_17 : f32 to vector<8x1xf32>
      %c0_18 = arith.constant 0 : index
      %c0_19 = arith.constant 0 : index
      %27 = vector.load %arg5[%c0_18, %c0_19] : memref<8x1xf32, #tpu.memory_space<vmem>>, vector<8x1xf32>
      tpu.vector_store %arg5[%c0_18, %c0_19], %26 {strides = array<i32>} : memref<8x1xf32, #tpu.memory_space<vmem>>, vector<8x1xf32>,
    } else {
    }
    %c0 = arith.constant 0 : index
    %c0_1 = arith.constant 0 : index
    %3 = vector.load %arg2[%c0, %c0_1] : memref<8x128xf32, #tpu.memory_space<vmem>>, vector<8x128xf32>
    %cst = arith.constant dense<0xFF800000> : vector<8xf32>
    %4 = vector.multi_reduction <maximumf>, %3, %cst [1] : vector<8x128xf32> to vector<8xf32>
    %5 = vector.shape_cast %4 : vector<8xf32> to vector<8x1xf32>
    %c0_2 = arith.constant 0 : index
    %c0_3 = arith.constant 0 : index
    %6 = vector.load %arg4[%c0_2, %c0_3] : memref<8x1xf32, #tpu.memory_space<vmem>>, vector<8x1xf32>
    %7 = arith.maximumf %6, %5 : vector<8x1xf32>
    %c0_4 = arith.constant 0 : index
    %c0_5 = arith.constant 0 : index
    %8 = vector.load %arg5[%c0_4, %c0_5] : memref<8x1xf32, #tpu.memory_space<vmem>>, vector<8x1xf32>
    %c0_6 = arith.constant 0 : index
    %c0_7 = arith.constant 0 : index
    %9 = vector.load %arg4[%c0_6, %c0_7] : memref<8x1xf32, #tpu.memory_space<vmem>>, vector<8x1xf32>
    %10 = arith.subf %9, %7 : vector<8x1xf32>
    %11 = math.exp %10 : vector<8x1xf32>
    %12 = arith.mulf %8, %11 : vector<8x1xf32>
    %13 = vector.broadcast %7 : vector<8x1xf32> to vector<8x128xf32>
    %14 = arith.subf %3, %13 : vector<8x128xf32>
    %15 = math.exp %14 : vector<8x128xf32>
    %cst_8 = arith.constant dense<0.000000e+00> : vector<8xf32>
    %16 = vector.multi_reduction <add>, %15, %cst_8 [1] : vector<8x128xf32> to vector<8xf32>
    %17 = vector.shape_cast %16 : vector<8xf32> to vector<8x1xf32>
    %18 = arith.addf %12, %17 : vector<8x1xf32>
    %c0_9 = arith.constant 0 : index
    %c0_10 = arith.constant 0 : index
    %19 = vector.load %arg5[%c0_9, %c0_10] : memref<8x1xf32, #tpu.memory_space<vmem>>, vector<8x1xf32>
    tpu.vector_store %arg5[%c0_9, %c0_10], %18 {strides = array<i32>} : memref<8x1xf32, #tpu.memory_space<vmem>>, vector<8x1xf32>,
    %c0_11 = arith.constant 0 : index
    %c0_12 = arith.constant 0 : index
    %20 = vector.load %arg4[%c0_11, %c0_12] : memref<8x1xf32, #tpu.memory_space<vmem>>, vector<8x1xf32>
    tpu.vector_store %arg4[%c0_11, %c0_12], %7 {strides = array<i32>} : memref<8x1xf32, #tpu.memory_space<vmem>>, vector<8x1xf32>,
    %c2_i32 = arith.constant 2 : i32
    %21 = arith.cmpi eq, %arg1, %c2_i32 : i32
    %22 = arith.extui %21 : i1 to i32
    %c0_i32_13 = arith.constant 0 : i32
    %23 = arith.cmpi ne, %22, %c0_i32_13 : i32
    scf.if %23 {
      %c0_14 = arith.constant 0 : index
      %c0_15 = arith.constant 0 : index
      %24 = vector.load %arg4[%c0_14, %c0_15] : memref<8x1xf32, #tpu.memory_space<vmem>>, vector<8x1xf32>
      %c0_16 = arith.constant 0 : index
      %c0_17 = arith.constant 0 : index
      %25 = vector.load %arg5[%c0_16, %c0_17] : memref<8x1xf32, #tpu.memory_space<vmem>>, vector<8x1xf32>
      %26 = math.log %25 : vector<8x1xf32>
      %27 = arith.addf %24, %26 : vector<8x1xf32>
      %c0_18 = arith.constant 0 : index
      %c0_19 = arith.constant 0 : index
      %28 = vector.load %arg3[%c0_18, %c0_19] : memref<8x1xf32, #tpu.memory_space<vmem>>, vector<8x1xf32>
      tpu.vector_store %arg3[%c0_18, %c0_19], %27 {strides = array<i32>} : memref<8x1xf32, #tpu.memory_space<vmem>>, vector<8x1xf32>,
    } else {
    }
    return
  }
  func.func @transform_0(%arg0: i32, %arg1: i32) -> (i32, i32) {
    %c0_i32 = arith.constant 0 : i32
    return %arg0, %arg1 : i32, i32
  }
  func.func @transform_1(%arg0: i32, %arg1: i32) -> (i32, i32) {
    %c0_i32 = arith.constant 0 : i32
    %c0_i32_0 = arith.constant 0 : i32
    return %arg0, %c0_i32 : i32, i32
  }
}

</mosaic_0001>

<llo_original>
// kernel: tpu_custom_call.1
$region0: #{tpu_custom_call.1}
  #allocation0 [shape = 'u32[]', space=smem, size = 0x4, offset = 0x4, fixed_abs, tag = 'smem constant byte address 0x4 - core index']
  #allocation1 [shape = 'u32[144,128]{1,0:T(1,128)}', space=vmem, size = 0x12000, scoped, tag = 'internal scratch']
  #allocation2 [shape = 'f32[8,1]{1,0:T(8,128)}', space=vmem, size = 0x1000, scoped, tag = 'scratch operand']
  #allocation3 [shape = 'f32[8,1]{1,0:T(8,128)}', space=vmem, size = 0x1000, scoped, tag = 'scratch operand']
  %s0 = inlined_call_operand.hbm [shape: f32[16,384], index: 0, kind: input, shape index: {}]
  %s1 = inlined_call_operand.vmem [shape: f32[16,1], index: 1, kind: output, shape index: {}]
  %s2 = sld [smem:[#allocation0]]
  $region49: #{tpu_custom_call.1} parent=0
    _
  %s4 = ssub.s32 1, %s2
  %s5 = scalar_select 0, %s4, %s2
  $region1: #{tpu_custom_call.1} parent=0
    #allocation4 [shape = 'u8[8192]{0}', space=vmem, size = 0x2000, scoped, tag = 'input window, operand 0']
    #allocation5 [shape = 's32[2]{0}', space=sflag, size = 0x8, scoped, tag = 'scoped memory for tpu_custom_call.1']
    %6 = vsyncpa [#allocation5], 0
    %s7 = scalar_lea.sflag [#allocation5], 1
    %8 = vsyncpa %s7, 0
    loop: start=0, step=1, limit=8
    $region2: #{tpu_custom_call.1} parent=1 // loop_pre_header
      _
    $region3: #{tpu_custom_call.1} parent=1 // loop_header
      %s10 = sphi 0, %s14
      %p11 = scmp.ge.s32.totalorder %s10, 8
      %s17 = sphi 0, %s29
      %s18 = sphi 0, %s25
      %s19 = sphi 0, %s17
      %s20 = sphi 0, %s18
      %s21 = sphi 0, %s19
      %s22 = sphi 0, %s20
      %s34 = sphi 0, %s36
      %s37 = sphi 0, %s34
      %s38 = sphi 0, %s37
      %s54 = sphi 0, %s38
      %s60 = sphi 0, %s62
      %s63 = sphi 0, %s60
      %s64 = sphi 0, %s63
      %s80 = sphi 0, %s64
    $region4: #{tpu_custom_call.1} parent=1 // loop_header_branch
      %13 = sbr.rel (%p11) target = $region8
    $region5: #{tpu_custom_call.1} parent=1 // loop_body
      %s15 = ssub.s32 %s10, 1
      %s16 = ssub.s32 %s10, 2
      %s23 = sadd.s32 1, %s18
      %p24 = scmp.ge.s32.totalorder %s23, 3
      %s25 = scalar_select %p24, 0, %s23
      %s26 = sadd.s32 1, %s17
      %s27 = scalar_select %p24, %s26, %s17
      %p28 = scmp.ge.s32.totalorder %s27, 2
      %s29 = scalar_select %p28, 0, %s27
      %s30 = ssub.s32 %s17, %s29
      %s31 = ssub.s32 %s18, %s25
      %s32 = sor.u32 %s30, %s31
      %p33 = scmp.eq.s32.totalorder %s32, 0
      %s35 = sadd.s32 %s34, 1
      %s36 = scalar_select %p33, %s34, %s35
      %p39 = pneg %p33
      %p40 = scmp.eq.s32.totalorder %s10, 5
      %p41 = por %p39, %p40
      %p42 = scmp.ne.s32.totalorder %s34, %s37
      %p43 = scmp.eq.s32.totalorder %s10, 0
      %p44 = por %p42, %p43
      %p45 = scmp.ne.s32.totalorder %s34, %s37
      %p46 = scmp.eq.s32.totalorder %s15, 5
      %p47 = por %p45, %p46
      %p48 = scmp.ne.s32.totalorder %s37, %s38
      %p49 = scmp.eq.s32.totalorder %s15, 0
      %p50 = por %p48, %p49
      %p51 = scmp.ne.s32.totalorder %s37, %s38
      %p52 = scmp.eq.s32.totalorder %s16, 5
      %p53 = por %p51, %p52
      %p55 = scmp.ne.s32.totalorder %s38, %s54
      %p56 = scmp.eq.s32.totalorder %s16, 0
      %p57 = por %p55, %p56
      %s58 = ssub.s32 %s17, %s29
      %p59 = scmp.eq.s32.totalorder %s58, 0
      %s61 = sadd.s32 %s60, 1
      %s62 = scalar_select %p59, %s60, %s61
      %p65 = pneg %p59
      %p66 = scmp.eq.s32.totalorder %s10, 5
      %p67 = por %p65, %p66
      %p68 = scmp.ne.s32.totalorder %s60, %s63
      %p69 = scmp.eq.s32.totalorder %s10, 0
      %p70 = por %p68, %p69
      %p71 = scmp.ne.s32.totalorder %s60, %s63
      %p72 = scmp.eq.s32.totalorder %s15, 5
      %p73 = por %p71, %p72
      %p74 = scmp.ne.s32.totalorder %s63, %s64
      %p75 = scmp.eq.s32.totalorder %s15, 0
      %p76 = por %p74, %p75
      %p77 = scmp.ne.s32.totalorder %s63, %s64
      %p78 = scmp.eq.s32.totalorder %s16, 5
      %p79 = por %p77, %p78
      %p81 = scmp.ne.s32.totalorder %s64, %s80
      %p82 = scmp.eq.s32.totalorder %s16, 0
      %p83 = por %p81, %p82
      %p84 = scmp.le.s32.totalorder 1, %s10
      %p85 = scmp.lt.s32.totalorder %s10, 7
      %p86 = pnand %p84, %p85
      %p87 = pneg %p86
      // Predicated region
      $region9: #{tpu_custom_call.1} parent=5 // pred_check
        _
      $region10: #{tpu_custom_call.1} parent=5 // pred_check_branch
        %89 = sbr.rel (%p86) target = $region12
      $region11: #{tpu_custom_call.1} parent=5 // pred_region
        %s90 = ssub.s32 %s10, 1
      $region12: #{tpu_custom_call.1} parent=5 // pred_fallthru
        _
      %p91 = scmp.lt.s32.totalorder %s10, 6
      // Predicated region
      $region13: #{tpu_custom_call.1} parent=5 // pred_check
        %p92 = pneg %p91
      $region14: #{tpu_custom_call.1} parent=5 // pred_check_branch
        %94 = sbr.rel (%p92) target = $region16
      $region15: #{tpu_custom_call.1} parent=5 // pred_region
        // Predicated region
        $region17: #{tpu_custom_call.1} parent=15 // pred_check
          %p95 = pneg %p44
        $region18: #{tpu_custom_call.1} parent=15 // pred_check_branch
          %97 = sbr.rel (%p95) target = $region20
        $region19: #{tpu_custom_call.1} parent=15 // pred_region
          %s98 = sand.u32 %s34, 1
          %s99 = scalar_lea.sflag [#allocation5], %s98
          %s100 = sand.u32 %s34, 1
          %s101 = smul.addr %s100, 8
          %s102 = scalar_lea.vmem [#allocation4], %s101
          %s104 = ssub.s32 128, 128
          %105 = vsyncadd %s99, %s104
          %s106 = smul.addr %s17, 3
          %s107 = sadd.s32 %s18, %s106
          %s108 = smul.addr %s107, 128
          %s109 = scalar_lea.hbm %s0, %s108
          %s111 = sshll.u32 %s102, 4
          %s112 = int_to_ptr.vmem [resolvable:$true] %s111
          %114 = dma.hbm_to_vmem [thread:$0]  %s109, 128, %s112, %s99
        $region20: #{tpu_custom_call.1} parent=15 // pred_fallthru
          _
      $region16: #{tpu_custom_call.1} parent=5 // pred_fallthru
        _
      %p115 = scmp.le.s32.totalorder 1, %s10
      %p116 = scmp.lt.s32.totalorder %s10, 7
      %p117 = pnand %p115, %p116
      %p118 = pneg %p117
      // Predicated region
      $region21: #{tpu_custom_call.1} parent=5 // pred_check
        _
      $region22: #{tpu_custom_call.1} parent=5 // pred_check_branch
        %120 = sbr.rel (%p117) target = $region24
      $region23: #{tpu_custom_call.1} parent=5 // pred_region
        %s121 = ssub.s32 %s10, 1
        %s122 = sand.u32 %s37, 1
        %s123 = scalar_lea.sflag [#allocation5], %s122
        %s124 = sand.u32 %s37, 1
        %s125 = smul.addr %s124, 8
        %s126 = scalar_lea.vmem [#allocation4], %s125
        // Predicated region
        $region25: #{tpu_custom_call.1} parent=23 // pred_check
          %p127 = pneg %p50
        $region26: #{tpu_custom_call.1} parent=23 // pred_check_branch
          %129 = sbr.rel (%p127) target = $region28
        $region27: #{tpu_custom_call.1} parent=23 // pred_region
          %130 = dma.done %s123, 128
        $region28: #{tpu_custom_call.1} parent=23 // pred_fallthru
          _
        %s131 = sand.u32 %s37, 1
        %s132 = scalar_lea.sflag [#allocation5], %s131
        %s133 = sand.u32 %s37, 1
        %s134 = smul.addr %s133, 8
        %s135 = scalar_lea.vmem [#allocation4], %s134
        %p136 = pneg %p50
        %p137 = pneg %p47
        %p138 = pneg %p76
        %p139 = pneg %p73
        %p140 = scmp.lt.s32.totalorder %s19, 1
        %s141 = scalar_select %p140, %s19, 1
        %s142 = smul.addr %s141, 8
        %s143 = scalar_lea.vmem %s1, %s142
        %p144 = scmp.lt.s32.totalorder %s19, 1
        %s145 = scalar_select %p144, %s19, 1
        %s146 = smul.addr %s145, 8
        %s147 = scalar_lea.vmem %s1, %s146
        %p148 = scmp.eq.s32.totalorder %s20, 0
        // Predicated region
        $region29: #{tpu_custom_call.1} parent=23 // pred_check
          %p149 = pneg %p148
        $region30: #{tpu_custom_call.1} parent=23 // pred_check_branch
          %151 = sbr.rel (%p149) target = $region32
        $region31: #{tpu_custom_call.1} parent=23 // pred_region
          %vm152 = vcmask 7168
          %153 = vst.msk [vmem:[#allocation2] sm:$0xff] %vm152, -inf
          %154 = vst.msk [vmem:[#allocation3] sm:$0xff] %vm152, 0.0
        $region32: #{tpu_custom_call.1} parent=23 // pred_fallthru
          _
        %v155 = vld [vmem:[%s126] sm:$0xff]
        %156 = vmax.xlane.f32.xlu0 %v155
        %v157 = vpop.xlane.xlu0 %156
        %v158 = vld [vmem:[#allocation2] sm:$0xff]
        %v159 = vmax.f32 %v158, %v157
        %v160 = vld [vmem:[#allocation3] sm:$0xff]
        %v161 = vsub.f32 %v158, %v159
        %v162 = vmul.f32 %v161, 1.442695
        %v163 = vpow.pop %v162
        %v164 = vmul.f32 %v160, %v163
        %166 = vset.pattern.permute.xlu0 0
        %167 = vperm.xlu0 %166, %v159
        %v168 = vpop.permute.xlu0 %167
        %v170 = vsub.f32 %v155, %v168
        %v171 = vmul.f32 %v170, 1.442695
        %v172 = vpow.pop %v171
        %173 = vadd.xlane.f32.xlu0 %v172
        %v174 = vpop.xlane.xlu0 %173
        %v175 = vadd.f32 %v164, %v174
        %vm176 = vcmask 7168
        %177 = vst.msk [vmem:[#allocation3] sm:$0xff] %vm176, %v175
        %178 = vst.msk [vmem:[#allocation2] sm:$0xff] %vm176, %v159
        %p179 = scmp.eq.s32.totalorder %s20, 2
        // Predicated region
        $region33: #{tpu_custom_call.1} parent=23 // pred_check
          %p180 = pneg %p179
        $region34: #{tpu_custom_call.1} parent=23 // pred_check_branch
          %182 = sbr.rel (%p180) target = $region36
        $region35: #{tpu_custom_call.1} parent=23 // pred_region
          %v183 = vld [vmem:[#allocation2] sm:$0xff]
          %v184 = vld [vmem:[#allocation3] sm:$0xff]
          %v185 = vlog2.pop %v184
          %v186 = vmul.f32 %v185, 0.6931472
          %v187 = vadd.f32 %v183, %v186
          %188 = vst.msk [vmem:[%s147] sm:$0xff] %vm176, %v187
        $region36: #{tpu_custom_call.1} parent=23 // pred_fallthru
          _
        %p189 = scmp.lt.s32.totalorder %s19, 1
        %s190 = scalar_select %p189, %s19, 1
        %s191 = smul.addr %s190, 8
        %s192 = scalar_lea.vmem %s1, %s191
        // Predicated region
        $region37: #{tpu_custom_call.1} parent=23 // pred_check
          %p193 = pneg %p73
        $region38: #{tpu_custom_call.1} parent=23 // pred_check_branch
          %195 = sbr.rel (%p193) target = $region40
        $region39: #{tpu_custom_call.1} parent=23 // pred_region
          _
        $region40: #{tpu_custom_call.1} parent=23 // pred_fallthru
          _
      $region24: #{tpu_custom_call.1} parent=5 // pred_fallthru
        _
      %p196 = scmp.le.s32.totalorder 2, %s10
      // Predicated region
      $region41: #{tpu_custom_call.1} parent=5 // pred_check
        %p197 = pneg %p196
      $region42: #{tpu_custom_call.1} parent=5 // pred_check_branch
        %199 = sbr.rel (%p197) target = $region44
      $region43: #{tpu_custom_call.1} parent=5 // pred_region
        %s200 = ssub.s32 %s10, 2
        // Predicated region
        $region45: #{tpu_custom_call.1} parent=43 // pred_check
          %p201 = pneg %p79
        $region46: #{tpu_custom_call.1} parent=43 // pred_check_branch
          %203 = sbr.rel (%p201) target = $region48
        $region47: #{tpu_custom_call.1} parent=43 // pred_region
          %p204 = scmp.lt.s32.totalorder %s21, 1
          %s205 = scalar_select %p204, %s21, 1
          %s206 = smul.addr %s205, 8
          %s207 = scalar_lea.vmem %s1, %s206
        $region48: #{tpu_custom_call.1} parent=43 // pred_fallthru
          _
      $region44: #{tpu_custom_call.1} parent=5 // pred_fallthru
        _
    $region6: #{tpu_custom_call.1} parent=1 // loop_footer
      %s14 = sadd.s32 1, %s10
    $region7: #{tpu_custom_call.1} parent=1 // loop_footer_branch
      %9 = sbr.rel target = $region3
    $region8: #{tpu_custom_call.1} parent=1 // loop_exit
      _
    %208 = vsyncpa [#allocation5], 1
    %s209 = scalar_lea.sflag [#allocation5], 1
    %210 = vsyncpa %s209, 1

</llo_original>
